<compile_context>
chip_gen: v6e
topology: v6e:2x2x1
jax: 0.10.0
libtpu: 0.0.40
codegen_flags: <defaults>
</compile_context>

<pallas_src>
import functools
from typing import NamedTuple

import jax
import jax.numpy as jnp
from jax.experimental import pallas as pl
from jax.experimental.pallas import tpu as pltpu


def _round_up(x, m):
    return ((x + m - 1) // m) * m


# ----------------------------------------------------------------------------
# Generation-aware VMEM budget (queried once at import time)
# ----------------------------------------------------------------------------
def _query_vmem():
    default_cap = 64 * 1024 * 1024  # v7x-sized fallback — safe on every gen
    cap = default_cap
    try:
        info_fn = getattr(pltpu, "get_tpu_info", None)
        if info_fn is not None:
            cap = int(info_fn().vmem_capacity_bytes)
    except Exception:
        cap = default_cap
    if cap <= 0:
        cap = default_cap
    budget = max(int(cap * 0.60), 12 * 1024 * 1024)   # tile footprint budget
    limit = max(min(int(cap * 0.75), 100 * 1024 * 1024), 32 * 1024 * 1024)
    return budget, limit


_VMEM_BUDGET_BYTES, _VMEM_LIMIT_BYTES = _query_vmem()


# ----------------------------------------------------------------------------
# Kernels
# ----------------------------------------------------------------------------
def _linear_kernel_single(x_ref, w_ref, b_ref, o_ref):
    """Whole K reduction in one MXU pass; bias fused; no scratch accumulator."""
    o_ref[...] = (
        jnp.dot(x_ref[...], w_ref[...], preferred_element_type=jnp.float32)
        + b_ref[...]
    ).astype(o_ref.dtype)


def _linear_kernel_ktiled(x_ref, w_ref, b_ref, o_ref, acc_ref):
    """(tm, tn) output tile accumulated over the K grid axis."""
    k = pl.program_id(2)

    @pl.when(k == 0)
    def _():
        acc_ref[...] = jnp.zeros_like(acc_ref)

    acc_ref[...] += jnp.dot(
        x_ref[...], w_ref[...], preferred_element_type=jnp.float32
    )

    @pl.when(k == pl.num_programs(2) - 1)
    def _():
        o_ref[...] = (acc_ref[...] + b_ref[...]).astype(o_ref.dtype)


# ----------------------------------------------------------------------------
# Tile selection
# ----------------------------------------------------------------------------
def _fp_single(tm, tn, tk, in_bytes):
    # double-buffered inputs + bias + double-buffered f32 output (no acc)
    return 2 * (tm * tk + tk * tn) * in_bytes + 2 * tn * 4 + 2 * tm * tn * 4


def _fp_ktiled(tm, tn, tk, in_bytes):
    # as above + resident f32 accumulator scratch
    return _fp_single(tm, tn, tk, in_bytes) + tm * tn * 4


def _largest_divisor_tile(total, cap, unit=128):
    """Largest multiple of `unit` that divides `total` and is <= cap."""
    units = total // unit
    d = max(1, min(units, cap // unit))
    while units % d:
        d -= 1
    return d * unit


def _choose_tiles(M, K_pad, N_pad, in_bytes, sub):
    budget = _VMEM_BUDGET_BYTES
    big = budget >= (60 << 20)           # raise caps together with the budget
    tm_cap = 512 if big else 256
    tn_cap = 1024 if big else 512

    m_r = _round_up(max(M, 1), sub)
    if m_r <= tm_cap:
        tm, M_pad = m_r, m_r
    else:
        tm = tm_cap
        M_pad = _round_up(M, tm)

    tn = _largest_divisor_tile(N_pad, tn_cap)

    # Prefer the single-shot path (grid_k == 1: no accumulator, no per-k grid
    # overhead, one MXU pass per output tile).
    if _fp_single(tm, tn, K_pad, in_bytes) <= budget:
        tk = K_pad
    else:
        tk = 128
        units = K_pad // 128
        for d in range(units, 0, -1):
            if units % d == 0 and _fp_ktiled(tm, tn, d * 128, in_bytes) <= budget:
                tk = d * 128
                break
        # Pathological shapes only: shrink tn, then tm, to stay in budget.
        while _fp_ktiled(tm, tn, tk, in_bytes) > budget and tn > 128:
            tn = _largest_divisor_tile(N_pad, tn // 2)
        while _fp_ktiled(tm, tn, tk, in_bytes) > budget and tm > sub:
            tm = _round_up(max(sub, tm // 2), sub)
            M_pad = _round_up(M, tm)

    grid_m = M_pad // tm
    grid_n = N_pad // tn
    grid_k = K_pad // tk

    # Megacore: make sure a "parallel" axis has >= 2 blocks when possible so
    # both v7x TensorCores get work (negligible overhead on 1-core chips).
    if grid_m * grid_n == 1:
        if N_pad // 128 >= 2:
            tn = _largest_divisor_tile(N_pad, N_pad // 2)
            grid_n = N_pad // tn
        elif _round_up(M, sub) >= 2 * sub:
            tm = _round_up(-(-M // 2), sub)
            M_pad = 2 * tm
            grid_m = 2

    return tm, tn, tk, M_pad, grid_m, grid_n, grid_k


# ----------------------------------------------------------------------------
# Parameter preparation (one-time; hoisted out of the per-call hot path)
# ----------------------------------------------------------------------------
class RegParams(NamedTuple):
    w_t: jax.Array   # (K_pad, N_pad), f32 or bf16
    b: jax.Array     # (1, N_pad), f32
    dim_in: int
    dim_out: int


def prepare_reg_params(weight, bias, *, use_bf16=False):
    """Transpose + pad + (optionally) cast the nn.Linear parameters once.

    weight: (dim_out, dim_in) in PyTorch layout; bias: (dim_out,).
    """
    dim_out, dim_in = weight.shape
    K_pad = _round_up(dim_in, 128)
    N_pad = _round_up(dim_out, 128)

    w_t = jnp.asarray(weight, jnp.float32).T          # (dim_in, dim_out)
    if (K_pad, N_pad) != (dim_in, dim_out):
        w_t = jnp.pad(w_t, ((0, K_pad - dim_in), (0, N_pad - dim_out)))
    if use_bf16:
        w_t = w_t.astype(jnp.bfloat16)

    b = jnp.asarray(bias, jnp.float32).reshape(1, dim_out)
    if N_pad != dim_out:
        b = jnp.pad(b, ((0, 0), (0, N_pad - dim_out)))

    return RegParams(w_t=jax.device_put(w_t), b=jax.device_put(b),
                     dim_in=dim_in, dim_out=dim_out)


# ----------------------------------------------------------------------------
# Forward
# ----------------------------------------------------------------------------
@functools.partial(jax.jit, static_argnames=("dim_out",))
def _reg_forward(x, w_t, b, *, dim_out):
    M, K = x.shape
    K_pad, N_pad = w_t.shape
    compute_dtype = w_t.dtype
    in_bytes = jnp.dtype(compute_dtype).itemsize
    sub = 16 if compute_dtype == jnp.bfloat16 else 8

    tm, tn, tk, M_pad, grid_m, grid_n, grid_k = _choose_tiles(
        M, K_pad, N_pad, in_bytes, sub)

    xp = x.astype(compute_dtype) if x.dtype != compute_dtype else x
    if (M_pad, K_pad) != (M, K):
        xp = jnp.pad(xp, ((0, M_pad - M), (0, K_pad - K)))

    cost = pl.CostEstimate(
        flops=2 * M_pad * K_pad * N_pad,
        transcendentals=0,
        bytes_accessed=(M_pad * K_pad + K_pad * N_pad) * in_bytes
        + (M_pad * N_pad + N_pad) * 4,
    )

    if grid_k == 1:
        # K fits in one block: single MXU pass per output tile, no scratch.
        out = pl.pallas_call(
            _linear_kernel_single,
            out_shape=jax.ShapeDtypeStruct((M_pad, N_pad), jnp.float32),
            grid_spec=pltpu.PrefetchScalarGridSpec(
                num_scalar_prefetch=0,
                grid=(grid_m, grid_n),
                in_specs=[
                    pl.BlockSpec((tm, K_pad), lambda i, j: (i, 0)),   # x tile
                    pl.BlockSpec((K_pad, tn), lambda i, j: (0, j)),   # w tile
                    pl.BlockSpec((1, tn), lambda i, j: (0, j)),       # bias
                ],
                out_specs=pl.BlockSpec((tm, tn), lambda i, j: (i, j)),
            ),
            compiler_params=pltpu.CompilerParams(
                dimension_semantics=("parallel", "parallel"),
                vmem_limit_bytes=_VMEM_LIMIT_BYTES,
            ),
            cost_estimate=cost,
        )(xp, w_t, b)
    else:
        # Large K: classic K-reduction grid with an f32 VMEM accumulator.
        out = pl.pallas_call(
            _linear_kernel_ktiled,
            out_shape=jax.ShapeDtypeStruct((M_pad, N_pad), jnp.float32),
            grid_spec=pltpu.PrefetchScalarGridSpec(
                num_scalar_prefetch=0,
                grid=(grid_m, grid_n, grid_k),
                in_specs=[
                    pl.BlockSpec((tm, tk), lambda i, j, k: (i, k)),   # x tile
                    pl.BlockSpec((tk, tn), lambda i, j, k: (k, j)),   # w tile
                    pl.BlockSpec((1, tn), lambda i, j, k: (0, j)),    # bias
                ],
                out_specs=pl.BlockSpec((tm, tn), lambda i, j, k: (i, j)),
                scratch_shapes=[pltpu.VMEM((tm, tn), jnp.float32)],
            ),
            compiler_params=pltpu.CompilerParams(
                dimension_semantics=("parallel", "parallel", "arbitrary"),
                vmem_limit_bytes=_VMEM_LIMIT_BYTES,
            ),
            cost_estimate=cost,
        )(xp, w_t, b)

    if M_pad != M or N_pad != dim_out:
        out = out[:M, :dim_out]
    return out


def reg_apply(params: RegParams, x):
    """y = Reg(x) for arbitrary leading dims (PyTorch nn.Linear semantics)."""
    assert x.shape[-1] == params.dim_in
    lead = x.shape[:-1]
    x2 = x.reshape(-1, params.dim_in)
    y = _reg_forward(x2, params.w_t, params.b, dim_out=params.dim_out)
    return y.reshape(*lead, params.dim_out)


# ----------------------------------------------------------------------------
# Self-test
# ----------------------------------------------------------------------------
def _make_params(key, dim_in, dim_out):
    """Deterministic nn.Linear-style init: U(-1/sqrt(dim_in), 1/sqrt(dim_in))."""
    kw, kb = jax.random.split(key)
    bound = 1.0 / jnp.sqrt(jnp.float32(dim_in))
    weight = jax.random.uniform(
        kw, (dim_out, dim_in), jnp.float32, minval=-bound, maxval=bound
    )  # PyTorch layout (dim_out, dim_in)
    bias = jax.random.uniform(
        kb, (dim_out,), jnp.float32, minval=-bound, maxval=bound
    )
    return weight, bias


if __name__ == "__main__":
    key = jax.random.PRNGKey(0)
    k1, k2, k3, k4 = jax.random.split(key, 4)

    # --- case 1: small aligned shapes consistent with Reg(dim_in, dim_out) ---
    batch, dim_in, dim_out = 8, 256, 128
    weight, bias = _make_params(k1, dim_in, dim_out)
    x = jax.random.normal(k2, (batch, dim_in), jnp.float32)

    params = prepare_reg_params(weight, bias)
    y = reg_apply(params, x)
    jax.block_until_ready(y)

    y_ref = x @ weight.T + bias
    assert y.shape == (batch, dim_out)
    assert jnp.allclose(y, y_ref, atol=1e-5, rtol=1e-5)

    # --- case 2: non-aligned shapes exercise the cdiv/padding path ---
    batch2, dim_in2, dim_out2 = 5, 300, 200
    weight2, bias2 = _make_params(k3, dim_in2, dim_out2)
    x2 = jax.random.normal(k4, (batch2, dim_in2), jnp.float32)

    params2 = prepare_reg_params(weight2, bias2)
    y2 = reg_apply(params2, x2)
    jax.block_until_ready(y2)

    y2_ref = x2 @ weight2.T + bias2
    assert y2.shape == (batch2, dim_out2)
    assert jnp.allclose(y2, y2_ref, atol=1e-5, rtol=1e-5)

    # --- case 3: bf16 weight/activation fast path (f32 accumulation) ---------
    params_bf16 = prepare_reg_params(weight, bias, use_bf16=True)
    y3 = reg_apply(params_bf16, x)
    jax.block_until_ready(y3)
    assert y3.shape == (batch, dim_out)
    assert jnp.allclose(y3, y_ref, atol=5e-2, rtol=5e-2)

    print("KERNEL_OK")
</pallas_src>

<mosaic_0001>
module attributes {stable_mosaic.version = 11 : i64} {
  func.func @_linear_kernel_single(%arg0: i32, %arg1: i32, %arg2: memref<8x256xf32, #tpu.memory_space<vmem>>, %arg3: memref<256x128xf32, #tpu.memory_space<vmem>>, %arg4: memref<1x128xf32, #tpu.memory_space<vmem>>, %arg5: memref<8x128xf32, #tpu.memory_space<vmem>>) attributes {dimension_semantics = [#tpu.dimension_semantics<parallel>, #tpu.dimension_semantics<parallel>], iteration_bounds = array<i64: 1, 1>, scalar_prefetch = 0 : i64, scratch_operands = 0 : i64, tpu.core_type = #tpu.core_type<tc>, window_params = [{transform_indices = @transform_0, window_bounds = array<i64: 8, 256>}, {transform_indices = @transform_1, window_bounds = array<i64: 256, 128>}, {transform_indices = @transform_2, window_bounds = array<i64: 1, 128>}, {transform_indices = @transform_3, window_bounds = array<i64: 8, 128>}]} {
    %c0 = arith.constant 0 : index
    %c0_0 = arith.constant 0 : index
    %0 = vector.load %arg2[%c0, %c0_0] : memref<8x256xf32, #tpu.memory_space<vmem>>, vector<8x256xf32>
    %c0_1 = arith.constant 0 : index
    %c0_2 = arith.constant 0 : index
    %1 = vector.load %arg3[%c0_1, %c0_2] : memref<256x128xf32, #tpu.memory_space<vmem>>, vector<256x128xf32>
    %cst = arith.constant dense<0.000000e+00> : vector<8x128xf32>
    %2 = tpu.matmul %0, %1, %cst {dimension_numbers = #tpu.dot_dimension_numbers<[1], [0], [0], [1], [0, 0, 1, 1], [], []>} : vector<8x256xf32>, vector<256x128xf32>, vector<8x128xf32> -> vector<8x128xf32>
    %c0_3 = arith.constant 0 : index
    %c0_4 = arith.constant 0 : index
    %3 = vector.load %arg4[%c0_3, %c0_4] : memref<1x128xf32, #tpu.memory_space<vmem>>, vector<1x128xf32>
    %4 = vector.broadcast %3 : vector<1x128xf32> to vector<8x128xf32>
    %5 = arith.addf %2, %4 : vector<8x128xf32>
    %c0_5 = arith.constant 0 : index
    %c0_6 = arith.constant 0 : index
    %6 = vector.load %arg5[%c0_5, %c0_6] : memref<8x128xf32, #tpu.memory_space<vmem>>, vector<8x128xf32>
    tpu.vector_store %arg5[%c0_5, %c0_6], %5 {strides = array<i32>} : memref<8x128xf32, #tpu.memory_space<vmem>>, vector<8x128xf32>,
    return
  }
  func.func @transform_0(%arg0: i32, %arg1: i32) -> (i32, i32) {
    %c0_i32 = arith.constant 0 : i32
    %c0_i32_0 = arith.constant 0 : i32
    return %arg0, %c0_i32 : i32, i32
  }
  func.func @transform_1(%arg0: i32, %arg1: i32) -> (i32, i32) {
    %c0_i32 = arith.constant 0 : i32
    %c0_i32_0 = arith.constant 0 : i32
    return %c0_i32, %arg1 : i32, i32
  }
  func.func @transform_2(%arg0: i32, %arg1: i32) -> (i32, i32) {
    %c0_i32 = arith.constant 0 : i32
    %c0_i32_0 = arith.constant 0 : i32
    return %c0_i32, %arg1 : i32, i32
  }
  func.func @transform_3(%arg0: i32, %arg1: i32) -> (i32, i32) {
    %c0_i32 = arith.constant 0 : i32
    return %arg0, %arg1 : i32, i32
  }
}

</mosaic_0001>

<llo_original>
// kernel: _reg_forward.1
$region0: #{_reg_forward.1}
  #allocation0 [shape = 'u32[]', space=smem, size = 0x4, offset = 0x4, fixed_abs, tag = 'smem constant byte address 0x4 - core index']
  #allocation1 [shape = 'u32[144,128]{1,0:T(1,128)}', space=vmem, size = 0x12000, scoped, tag = 'internal scratch']
  %s0 = inlined_call_operand.hbm [shape: f32[8,256], index: 0, kind: input, shape index: {}]
  %s1 = inlined_call_operand.hbm [shape: f32[256,128], index: 1, kind: input, shape index: {}]
  %s2 = inlined_call_operand.vmem [shape: f32[1,128], index: 2, kind: input, shape index: {}]
  %s3 = inlined_call_operand.hbm [shape: f32[8,128], index: 3, kind: output, shape index: {}]
  %s4 = sld [smem:[#allocation0]]
  $region30: #{_reg_forward.1} parent=0
    _
  %s6 = ssub.s32 1, %s4
  %s7 = scalar_select 0, %s6, %s4
  $region1: #{_reg_forward.1} parent=0
    #allocation2 [shape = 'u8[8192]{0}', space=vmem, size = 0x2000, scoped, tag = 'input window, operand 0, single buffered']
    #allocation3 [shape = 's32[1]{0}', space=sflag, size = 0x4, scoped, tag = 'scoped memory for _reg_forward.1']
    #allocation4 [shape = 's32[1]{0}', space=sflag, size = 0x4, scoped, tag = 'scoped memory for _reg_forward.1']
    #allocation5 [shape = 'u8[131072]{0}', space=vmem, size = 0x20000, scoped, tag = 'input window, operand 1, single buffered']
    #allocation6 [shape = 's32[1]{0}', space=sflag, size = 0x4, scoped, tag = 'scoped memory for _reg_forward.1']
    #allocation7 [shape = 'u8[4096]{0}', space=vmem, size = 0x1000, scoped, tag = 'output window, operand 0, single buffered']
    %8 = vsyncpa [#allocation3], 0
    %9 = vsyncpa [#allocation6], 0
    %10 = vsyncpa [#allocation4], 0
    // Predicated region
    $region2: #{_reg_forward.1} parent=1 // pred_check
      _
    $region3: #{_reg_forward.1} parent=1 // pred_check_branch
      %12 = sbr.rel (0) target = $region5
    $region4: #{_reg_forward.1} parent=1 // pred_region
      %s14 = ssub.s32 256, 256
      %15 = vsyncadd [#allocation3], %s14
      %s17 = sshll.u32 [#allocation2], 4
      %s18 = int_to_ptr.vmem [resolvable:$true] %s17
      %20 = dma.hbm_to_vmem [thread:$0]  %s0, 256, %s18, [#allocation3]
    $region5: #{_reg_forward.1} parent=1 // pred_fallthru
      _
    // Predicated region
    $region6: #{_reg_forward.1} parent=1 // pred_check
      _
    $region7: #{_reg_forward.1} parent=1 // pred_check_branch
      %22 = sbr.rel (0) target = $region9
    $region8: #{_reg_forward.1} parent=1 // pred_region
      %s24 = ssub.s32 4096, 4096
      %25 = vsyncadd [#allocation6], %s24
      %s26 = sshll.u32 [#allocation5], 4
      %s27 = int_to_ptr.vmem [resolvable:$true] %s26
      %32 = dma.hbm_to_vmem [thread:$0]  %s1, 4096, %s27, [#allocation6], 128, 128, 8
    $region9: #{_reg_forward.1} parent=1 // pred_fallthru
      _
    // Predicated region
    $region10: #{_reg_forward.1} parent=1 // pred_check
      _
    $region11: #{_reg_forward.1} parent=1 // pred_check_branch
      %34 = sbr.rel (0) target = $region13
    $region12: #{_reg_forward.1} parent=1 // pred_region
      _
    $region13: #{_reg_forward.1} parent=1 // pred_fallthru
      _
    // Predicated region
    $region14: #{_reg_forward.1} parent=1 // pred_check
      _
    $region15: #{_reg_forward.1} parent=1 // pred_check_branch
      %36 = sbr.rel (0) target = $region17
    $region16: #{_reg_forward.1} parent=1 // pred_region
      %37 = dma.done [#allocation3], 256
    $region17: #{_reg_forward.1} parent=1 // pred_fallthru
      _
    // Predicated region
    $region18: #{_reg_forward.1} parent=1 // pred_check
      _
    $region19: #{_reg_forward.1} parent=1 // pred_check_branch
      %39 = sbr.rel (0) target = $region21
    $region20: #{_reg_forward.1} parent=1 // pred_region
      %40 = dma.done [#allocation6], 4096
    $region21: #{_reg_forward.1} parent=1 // pred_fallthru
      _
    %v41 = vld [vmem:[#allocation2] sm:$0xff]
    %v42 = vld [vmem:[#allocation2 + $0x8] sm:$0xff]
    %v43 = vld [vmem:[#allocation5] sm:$0xff]
    %v44 = vld [vmem:[#allocation5 + $0x8] sm:$0xff]
    %v45 = vld [vmem:[#allocation5 + $0x10] sm:$0xff]
    %v46 = vld [vmem:[#allocation5 + $0x18] sm:$0xff]
    %v47 = vld [vmem:[#allocation5 + $0x20] sm:$0xff]
    %v48 = vld [vmem:[#allocation5 + $0x28] sm:$0xff]
    %v49 = vld [vmem:[#allocation5 + $0x30] sm:$0xff]
    %v50 = vld [vmem:[#allocation5 + $0x38] sm:$0xff]
    %v51 = vld [vmem:[#allocation5 + $0x40] sm:$0xff]
    %v52 = vld [vmem:[#allocation5 + $0x48] sm:$0xff]
    %v53 = vld [vmem:[#allocation5 + $0x50] sm:$0xff]
    %v54 = vld [vmem:[#allocation5 + $0x58] sm:$0xff]
    %v55 = vld [vmem:[#allocation5 + $0x60] sm:$0xff]
    %v56 = vld [vmem:[#allocation5 + $0x68] sm:$0xff]
    %v57 = vld [vmem:[#allocation5 + $0x70] sm:$0xff]
    %v58 = vld [vmem:[#allocation5 + $0x78] sm:$0xff]
    %v59 = vld [vmem:[#allocation5 + $0x80] sm:$0xff]
    %v60 = vld [vmem:[#allocation5 + $0x88] sm:$0xff]
    %v61 = vld [vmem:[#allocation5 + $0x90] sm:$0xff]
    %v62 = vld [vmem:[#allocation5 + $0x98] sm:$0xff]
    %v63 = vld [vmem:[#allocation5 + $0xa0] sm:$0xff]
    %v64 = vld [vmem:[#allocation5 + $0xa8] sm:$0xff]
    %v65 = vld [vmem:[#allocation5 + $0xb0] sm:$0xff]
    %v66 = vld [vmem:[#allocation5 + $0xb8] sm:$0xff]
    %v67 = vld [vmem:[#allocation5 + $0xc0] sm:$0xff]
    %v68 = vld [vmem:[#allocation5 + $0xc8] sm:$0xff]
    %v69 = vld [vmem:[#allocation5 + $0xd0] sm:$0xff]
    %v70 = vld [vmem:[#allocation5 + $0xd8] sm:$0xff]
    %v71 = vld [vmem:[#allocation5 + $0xe0] sm:$0xff]
    %v72 = vld [vmem:[#allocation5 + $0xe8] sm:$0xff]
    %v73 = vld [vmem:[#allocation5 + $0xf0] sm:$0xff]
    %v74 = vld [vmem:[#allocation5 + $0xf8] sm:$0xff]
    %v75 = vld [vmem:[%s2] sm:$0x1]
    %v77 = vlaneseq
    %v78 = vshrl.u32 %v77, 7
    %v79 = vsub.s32 0, %v78
    %v80 = vrot.slane %v75, %v79
    %82 = vmatprep.subr.mxu0 0.0
    %83 = vmatpush1.msra.mxu0 %v58
    %84 = vmatprep.subr.mxu0 0.0
    %85 = vmatpush1.msra.mxu0 %v57
    %86 = vmatprep.subr.mxu0 0.0
    %87 = vmatpush1.msra.mxu0 %v56
    %88 = vmatprep.subr.mxu0 0.0
    %89 = vmatpush1.msra.mxu0 %v55
    %90 = vmatprep.subr.mxu0 0.0
    %91 = vmatpush1.msra.mxu0 %v54
    %92 = vmatprep.subr.mxu0 0.0
    %93 = vmatpush1.msra.mxu0 %v53
    %94 = vmatprep.subr.mxu0 0.0
    %95 = vmatpush1.msra.mxu0 %v52
    %96 = vmatprep.subr.mxu0 0.0
    %97 = vmatpush1.msra.mxu0 %v51
    %98 = vmatprep.subr.mxu0 0.0
    %99 = vmatpush1.msra.mxu0 %v50
    %100 = vmatprep.subr.mxu0 0.0
    %101 = vmatpush1.msra.mxu0 %v49
    %102 = vmatprep.subr.mxu0 0.0
    %103 = vmatpush1.msra.mxu0 %v48
    %104 = vmatprep.subr.mxu0 0.0
    %105 = vmatpush1.msra.mxu0 %v47
    %106 = vmatprep.subr.mxu0 0.0
    %107 = vmatpush1.msra.mxu0 %v46
    %108 = vmatprep.subr.mxu0 0.0
    %109 = vmatpush1.msra.mxu0 %v45
    %110 = vmatprep.subr.mxu0 0.0
    %111 = vmatpush1.msra.mxu0 %v44
    %112 = vmatprep.subr.mxu0 0.0
    %113 = vmatpush1.msra.mxu0 %v43
    %114 = vmatprep.subr.mxu0 0.0
    %115 = vmatpush2.msra.mxu0 %v74
    %116 = vmatprep.subr.mxu0 0.0
    %117 = vmatpush2.msra.mxu0 %v73
    %118 = vmatprep.subr.mxu0 0.0
    %119 = vmatpush2.msra.mxu0 %v72
    %120 = vmatprep.subr.mxu0 0.0
    %121 = vmatpush2.msra.mxu0 %v71
    %122 = vmatprep.subr.mxu0 0.0
    %123 = vmatpush2.msra.mxu0 %v70
    %124 = vmatprep.subr.mxu0 0.0
    %125 = vmatpush2.msra.mxu0 %v69
    %126 = vmatprep.subr.mxu0 0.0
    %127 = vmatpush2.msra.mxu0 %v68
    %128 = vmatprep.subr.mxu0 0.0
    %129 = vmatpush2.msra.mxu0 %v67
    %130 = vmatprep.subr.mxu0 0.0
    %131 = vmatpush2.msra.mxu0 %v66
    %132 = vmatprep.subr.mxu0 0.0
    %133 = vmatpush2.msra.mxu0 %v65
    %134 = vmatprep.subr.mxu0 0.0
    %135 = vmatpush2.msra.mxu0 %v64
    %136 = vmatprep.subr.mxu0 0.0
    %137 = vmatpush2.msra.mxu0 %v63
    %138 = vmatprep.subr.mxu0 0.0
    %139 = vmatpush2.msra.mxu0 %v62
    %140 = vmatprep.subr.mxu0 0.0
    %141 = vmatpush2.msra.mxu0 %v61
    %142 = vmatprep.subr.mxu0 0.0
    %143 = vmatpush2.msra.mxu0 %v60
    %144 = vmatprep.subr.mxu0 0.0
    %145 = vmatpush2.msra.mxu0 %v59
    %146 = vmatprep.mubr.f32.mxu0 %v42
    %147 = vmatmul.mubr.f32.gmra.mxu0 %v41
    %v148 = vpop.f32.mrf.mxu0
    %v149 = vadd.f32 %v80, %v148
    %v150 = vpop.f32.mrf.mxu0
    %151 = vdwg.mxu0
    %152 = vst [vmem:[#allocation7] sm:$0xff] %v149
    // Predicated region
    $region22: #{_reg_forward.1} parent=1 // pred_check
      _
    $region23: #{_reg_forward.1} parent=1 // pred_check_branch
      %154 = sbr.rel (0) target = $region25
    $region24: #{_reg_forward.1} parent=1 // pred_region
      %s156 = ssub.s32 128, 128
      %157 = vsyncadd [#allocation4], %s156
      %s159 = sshll.u32 [#allocation7], 4
      %s160 = int_to_ptr.vmem [resolvable:$true] %s159
      %162 = dma.vmem_to_hbm [thread:$0]  %s160, 128, %s3, [#allocation4]
    $region25: #{_reg_forward.1} parent=1 // pred_fallthru
      _
    // Predicated region
    $region26: #{_reg_forward.1} parent=1 // pred_check
      _
    $region27: #{_reg_forward.1} parent=1 // pred_check_branch
      %164 = sbr.rel (0) target = $region29
    $region28: #{_reg_forward.1} parent=1 // pred_region
      %165 = dma.done [#allocation4], 128
    $region29: #{_reg_forward.1} parent=1 // pred_fallthru
      _
    %166 = vsyncpa [#allocation3], 1
    %167 = vsyncpa [#allocation6], 1
    %168 = vsyncpa [#allocation4], 1

</llo_original>
